<compile_context>
chip_gen: v7x
topology: tpu7x:2x2x1
jax: 0.10.0
libtpu: 0.0.40
codegen_flags: <defaults>
</compile_context>

<pallas_src>
import functools

import jax
import jax.numpy as jnp
from jax.experimental import pallas as pl
from jax.experimental.pallas import tpu as pltpu

_MB = 1024 * 1024


def _round_up(x, m):
    return ((x + m - 1) // m) * m


def _clamp(x, lo, hi):
    hi = max(hi, lo)
    return max(lo, min(hi, x))


def _vmem_capacity_bytes():
    try:
        return int(pltpu.get_tpu_info().vmem_capacity_bytes)
    except Exception:
        return 64 * _MB          # conservative (v7x-sized) default


# ---------------------------------------------------------------------------
# Kernel 1: row-wise L2 normalization (F.normalize(x, p=2, dim=1)) -> bf16
# ---------------------------------------------------------------------------
def _l2_normalize_kernel(x_ref, o_ref):
    x = x_ref[...].astype(jnp.float32)
    ssq = jnp.sum(x * x, axis=-1, keepdims=True)
    # F.normalize clamps the norm at 1e-12 -> clamp norm^2 at 1e-24; rsqrt -> EUP
    o_ref[...] = (x * jax.lax.rsqrt(jnp.maximum(ssq, 1e-24))).astype(o_ref.dtype)


def l2_normalize_rows(x, *, tile_rows=512, out_dtype=jnp.bfloat16):
    n, d = x.shape
    assert n % tile_rows == 0 and d % 128 == 0
    cap = _vmem_capacity_bytes()
    vmem_limit = _clamp(4 * tile_rows * d * (4 + 2) + 4 * _MB, 16 * _MB, cap - 16 * _MB)
    return pl.pallas_call(
        _l2_normalize_kernel,
        out_shape=jax.ShapeDtypeStruct((n, d), out_dtype),
        grid_spec=pltpu.PrefetchScalarGridSpec(
            num_scalar_prefetch=0,
            grid=(n // tile_rows,),
            in_specs=[pl.BlockSpec((tile_rows, d), lambda i: (i, 0))],
            out_specs=pl.BlockSpec((tile_rows, d), lambda i: (i, 0)),
        ),
        compiler_params=pltpu.CompilerParams(
            dimension_semantics=("parallel",),
            vmem_limit_bytes=vmem_limit,
        ),
    )(x)


# ---------------------------------------------------------------------------
# Shared helper: write [loss_sum, weight_sum] into a lane-dense (1, 8, 128) block
# ---------------------------------------------------------------------------
def _write_partial(partial_ref, lsum, wsum):
    shape = partial_ref.shape
    sub = jax.lax.broadcasted_iota(jnp.int32, shape, len(shape) - 2)
    lane = jax.lax.broadcasted_iota(jnp.int32, shape, len(shape) - 1)
    val = jnp.where((sub == 0) & (lane == 0), lsum, jnp.zeros(shape, jnp.float32))
    val = jnp.where((sub == 0) & (lane == 1), wsum, val)
    partial_ref[...] = val


# ---------------------------------------------------------------------------
# Kernel 2a: sampled softmax with the normalized item table RESIDENT in VMEM.
#   scores = normalize(out_tile) @ table^T   (MXU)
#   logits[:, 0]   = score at the target id          (lane gather)
#   logits[:, 1:K] = scores at the sampled negatives (lane gather)
#   cross-entropy(label 0) + weighted partial sums.
# ---------------------------------------------------------------------------
def _sampled_softmax_resident_kernel(out_ref, idx_ref, w_ref, table_ref, partial_ref,
                                     *, temperature, num_negatives, v_chunk):
    f32 = jnp.float32
    tile_rows = out_ref.shape[0]
    vp = table_ref.shape[0]
    kl = idx_ref.shape[1]
    kl_blocks = kl // 128
    sub_per = v_chunk // 128
    n_chunks = vp // v_chunk

    # normalize the model outputs (F.normalize(valid_output, p=2, dim=1)) in f32
    x = out_ref[...].astype(f32)
    ssq = jnp.sum(x * x, axis=-1, keepdims=True)
    xn = x * jax.lax.rsqrt(jnp.maximum(ssq, 1e-24))

    idx = idx_ref[...]                                         # [T, KL] int32
    idx_hi = jax.lax.shift_right_logical(idx, 7)               # item id // 128
    idx_lo = jnp.bitwise_and(idx, 127)                         # item id %  128

    def one_chunk(c, blocks):
        start = c * v_chunk
        if not isinstance(c, int):
            start = pl.multiple_of(start, v_chunk)
        tab_c = table_ref[pl.ds(start, v_chunk), :].astype(f32)          # [vc, Dp]
        # scores for this slab of items: [T, Dp] x [vc, Dp]^T -> [T, vc] on the MXU
        s_c = jax.lax.dot_general(xn, tab_c, (((1,), (1,)), ((), ())),
                                  preferred_element_type=f32)
        new_blocks = []
        for kb in range(kl_blocks):
            acc = blocks[kb]
            hi_b = idx_hi[:, kb * 128:(kb + 1) * 128]
            lo_b = idx_lo[:, kb * 128:(kb + 1) * 128]
            for j in range(sub_per):
                sub = s_c[:, j * 128:(j + 1) * 128]                       # [T, 128]
                g = jnp.take_along_axis(sub, lo_b, axis=1)                # [T, 128]
                acc = jnp.where(hi_b == c * sub_per + j, g, acc)
            new_blocks.append(acc)
        return tuple(new_blocks)

    init = tuple(jnp.zeros((tile_rows, 128), f32) for _ in range(kl_blocks))
    if n_chunks <= 8:
        blocks = init
        for c in range(n_chunks):                 # static unroll for small tables
            blocks = one_chunk(c, blocks)
    else:
        blocks = jax.lax.fori_loop(0, n_chunks, one_chunk, init)
    logits = blocks[0] if kl_blocks == 1 else jnp.concatenate(blocks, axis=1)

    # torch clamps the raw cosine logits to [-10, 10]; with L2-normalized inputs this is
    # a mathematical no-op, so it is dropped (perf review).  The +/-20 clamp after the
    # temperature scaling is kept.
    inv_t = f32(1.0 / temperature)
    scaled = jnp.clip(logits * inv_t, -20.0, 20.0)
    col = jax.lax.broadcasted_iota(jnp.int32, scaled.shape, 1)
    scaled = jnp.where(col <= num_negatives, scaled, f32(-1e30))   # col0 = positive
    m = jnp.max(scaled, axis=-1, keepdims=True)
    s = jnp.sum(jnp.exp(scaled - m), axis=-1, keepdims=True)
    loss = (m + jnp.log(s)) - scaled[:, 0:1]                        # CE with label 0

    w = jnp.maximum(w_ref[...].astype(f32), 0.0)                    # [T, 1]
    _write_partial(partial_ref, jnp.sum(loss * w), jnp.sum(w))


def _run_resident(out_p, comb_p, w_p, norm_table, *, tile_rows, temperature,
                  num_negatives, v_chunk, vmem_limit):
    n_pad, dp = out_p.shape
    vp = norm_table.shape[0]
    kl = comb_p.shape[1]
    num_tiles = n_pad // tile_rows
    kernel = functools.partial(_sampled_softmax_resident_kernel,
                               temperature=temperature,
                               num_negatives=num_negatives,
                               v_chunk=v_chunk)
    partials = pl.pallas_call(
        kernel,
        out_shape=jax.ShapeDtypeStruct((num_tiles, 8, 128), jnp.float32),
        grid_spec=pltpu.PrefetchScalarGridSpec(
            num_scalar_prefetch=0,
            grid=(num_tiles,),
            in_specs=[
                pl.BlockSpec((tile_rows, dp), lambda i: (i, 0)),
                pl.BlockSpec((tile_rows, kl), lambda i: (i, 0)),
                pl.BlockSpec((tile_rows, 1), lambda i: (i, 0)),
                pl.BlockSpec((vp, dp), lambda i: (0, 0)),     # table resident in VMEM
            ],
            out_specs=pl.BlockSpec((1, 8, 128), lambda i: (i, 0, 0)),
        ),
        compiler_params=pltpu.CompilerParams(
            dimension_semantics=("parallel",),
            vmem_limit_bytes=vmem_limit,
        ),
    )(out_p, comb_p, w_p, norm_table)
    return jnp.sum(partials[:, 0, 0]), jnp.sum(partials[:, 0, 1])


# ---------------------------------------------------------------------------
# Kernel 2b (fallback): streamed pos/neg embeddings (table too large for VMEM).
# TODO(synk): a K grid axis + in-kernel DMA gather would avoid materializing the
#             [N, Kp, Dp] tensor in HBM entirely; kept simple since it is only
#             the large-catalog fallback path.
# ---------------------------------------------------------------------------
def _sampled_softmax_streamed_kernel(out_ref, pos_ref, neg_ref, w_ref, partial_ref,
                                     *, temperature, num_negatives, k_chunk):
    f32 = jnp.float32
    x = out_ref[...].astype(f32)
    xn = x * jax.lax.rsqrt(jnp.maximum(jnp.sum(x * x, axis=-1, keepdims=True), 1e-24))
    inv_t = f32(1.0 / temperature)

    pos = pos_ref[...].astype(f32)
    pos_s = jnp.clip(jnp.sum(xn * pos, axis=-1, keepdims=True) * inv_t, -20.0, 20.0)

    kp = neg_ref.shape[1]
    n_chunks = kp // k_chunk
    full = num_negatives // k_chunk
    tail = num_negatives - full * k_chunk

    m = pos_s                                   # the positive is column 0
    s = jnp.ones_like(pos_s)
    for c in range(n_chunks):                   # static, fully unrolled
        neg_c = neg_ref[:, c * k_chunk:(c + 1) * k_chunk, :].astype(f32)   # [T, KC, Dp]
        l_c = jnp.sum(xn[:, None, :] * neg_c, axis=-1)                      # [T, KC]
        l_c = jnp.clip(l_c * inv_t, -20.0, 20.0)
        if c == full:                           # only the tail chunk has padded columns
            col = jax.lax.broadcasted_iota(jnp.int32, l_c.shape, 1)
            l_c = jnp.where(col < tail, l_c, f32(-1e30))
        m_new = jnp.maximum(m, jnp.max(l_c, axis=-1, keepdims=True))
        s = s * jnp.exp(m - m_new) + jnp.sum(jnp.exp(l_c - m_new), axis=-1, keepdims=True)
        m = m_new

    loss = (m + jnp.log(s)) - pos_s
    w = jnp.maximum(w_ref[...].astype(f32), 0.0)
    _write_partial(partial_ref, jnp.sum(loss * w), jnp.sum(w))


def _run_streamed(out_p, pos_p, neg_p, w_p, *, tile_rows, temperature, num_negatives,
                  k_chunk, vmem_limit):
    n_pad, dp = out_p.shape
    kp = neg_p.shape[1]
    num_tiles = n_pad // tile_rows
    kernel = functools.partial(_sampled_softmax_streamed_kernel,
                               temperature=temperature,
                               num_negatives=num_negatives,
                               k_chunk=k_chunk)
    partials = pl.pallas_call(
        kernel,
        out_shape=jax.ShapeDtypeStruct((num_tiles, 8, 128), jnp.float32),
        grid_spec=pltpu.PrefetchScalarGridSpec(
            num_scalar_prefetch=0,
            grid=(num_tiles,),
            in_specs=[
                pl.BlockSpec((tile_rows, dp), lambda i: (i, 0)),
                pl.BlockSpec((tile_rows, dp), lambda i: (i, 0)),
                pl.BlockSpec((tile_rows, kp, dp), lambda i: (i, 0, 0)),
                pl.BlockSpec((tile_rows, 1), lambda i: (i, 0)),
            ],
            out_specs=pl.BlockSpec((1, 8, 128), lambda i: (i, 0, 0)),
        ),
        compiler_params=pltpu.CompilerParams(
            dimension_semantics=("parallel",),
            vmem_limit_bytes=vmem_limit,
        ),
    )(out_p, pos_p, neg_p, w_p)
    return jnp.sum(partials[:, 0, 0]), jnp.sum(partials[:, 0, 1])


# ---------------------------------------------------------------------------
# Wrapper: reshapes, negative sampling, normalization, padding, path choice,
# final scalar reduction.
# ---------------------------------------------------------------------------
def sampled_softmax_loss(output_embeddings, target_ids, all_item_embeddings,
                         supervision_weights, *, num_negatives=100, temperature=0.05,
                         rng_key=None, force_impl=None):
    B, Lm1, D = output_embeddings.shape
    V = all_item_embeddings.shape[0]            # num_items + 1
    num_items = V - 1
    N = B * Lm1
    Dp = _round_up(D, 128)

    flat_out = output_embeddings.reshape(N, D)
    flat_tgt = target_ids.reshape(N).astype(jnp.int32)
    flat_w = supervision_weights.reshape(N).astype(jnp.float32)

    # --- negative sampling (jax RNG; same resample-once collision handling) ----------
    # TODO(synk): torch samples in [4, num_items + 4) which can index past the
    # [num_items + 1, D] table; we keep sampling in-bounds [4, num_items + 1).
    if rng_key is None:
        rng_key = jax.random.PRNGKey(0)
    k1, k2 = jax.random.split(rng_key)
    high = num_items + 1
    neg0 = jax.random.randint(k1, (N, num_negatives), 4, high, dtype=jnp.int32)
    neg1 = jax.random.randint(k2, (N, num_negatives), 4, high, dtype=jnp.int32)
    neg_idx = jnp.where(neg0 != flat_tgt[:, None], neg0, neg1)

    # --- normalize the item table with the Pallas kernel (bf16, padded) --------------
    Vp = _round_up(V, 512)
    table = jnp.pad(all_item_embeddings.astype(jnp.float32),
                    ((0, Vp - V), (0, Dp - D)))
    norm_table = l2_normalize_rows(table, tile_rows=512)        # bf16 [Vp, Dp]

    # --- choose the implementation from the VMEM budget ------------------------------
    vmem_cap = _vmem_capacity_bytes()
    table_bytes = Vp * Dp * 2
    resident_ok = (2 * table_bytes + 16 * _MB) <= (vmem_cap - 24 * _MB)
    if force_impl == "resident":
        use_resident = True
    elif force_impl == "stream":
        use_resident = False
    else:
        use_resident = resident_ok

    if use_resident:
        desired = 256 if (vmem_cap >= 96 * _MB or Dp <= 256) else 128
        tile_rows = min(desired, max(8, _round_up(N, 8)))
    else:
        k_chunk = 32
        Kp = _round_up(num_negatives, k_chunk)
        budget = max(24 * _MB, vmem_cap - 24 * _MB)
        tile_rows = 8
        for t in (512, 256, 128, 64, 32, 16, 8):
            need = 2 * t * Kp * Dp * 2 + 4 * t * Dp * 2 + 2 * t * 128 * 4 + 8 * _MB
            if need <= budget:
                tile_rows = t
                break
        tile_rows = min(tile_rows, max(8, _round_up(N, 8)))

    n_pad = _round_up(N, tile_rows)
    if n_pad // tile_rows > 1 and (n_pad // tile_rows) % 2 == 1:
        n_pad += tile_rows                      # even tile count -> balanced megacore split
    pad_n = n_pad - N

    out_p = jnp.pad(flat_out, ((0, pad_n), (0, Dp - D))).astype(jnp.bfloat16)
    w_p = jnp.pad(flat_w, (0, pad_n)).reshape(n_pad, 1)

    if use_resident:
        KL = _round_up(1 + num_negatives, 128)
        parts = [flat_tgt[:, None], neg_idx]
        if KL - 1 - num_negatives:
            parts.append(jnp.zeros((N, KL - 1 - num_negatives), jnp.int32))
        comb = jnp.concatenate(parts, axis=1)                    # [N, KL] int32
        comb_p = jnp.pad(comb, ((0, pad_n), (0, 0)))
        v_chunk = 512
        vmem_limit = _clamp(
            2 * table_bytes
            + 2 * tile_rows * (Dp * 2 + KL * 4 + 128 * 4)
            + tile_rows * Dp * 4 + tile_rows * v_chunk * 4 + v_chunk * Dp * 4
            + 4 * tile_rows * KL * 4 + 8 * _MB,
            32 * _MB, vmem_cap - 16 * _MB)
        lsum, wsum = _run_resident(out_p, comb_p, w_p, norm_table,
                                   tile_rows=tile_rows, temperature=temperature,
                                   num_negatives=num_negatives, v_chunk=v_chunk,
                                   vmem_limit=vmem_limit)
    else:
        tgt_p = jnp.pad(flat_tgt, (0, pad_n))
        neg_idx_p = jnp.pad(neg_idx, ((0, pad_n), (0, Kp - num_negatives)))
        pos_p = norm_table[tgt_p]               # [n_pad, Dp]     bf16 (small gather)
        neg_p = norm_table[neg_idx_p]           # [n_pad, Kp, Dp] bf16 (large; fallback only)
        vmem_limit = _clamp(
            2 * tile_rows * Kp * Dp * 2 + 4 * tile_rows * Dp * 2
            + 2 * tile_rows * 128 * 4 + 16 * _MB,
            32 * _MB, vmem_cap - 16 * _MB)
        lsum, wsum = _run_streamed(out_p, pos_p, neg_p, w_p,
                                   tile_rows=tile_rows, temperature=temperature,
                                   num_negatives=num_negatives, k_chunk=k_chunk,
                                   vmem_limit=vmem_limit)

    # reference: "if valid_mask.sum() == 0: return 0.0"
    return jnp.where(wsum > 0.0, lsum / jnp.maximum(wsum, 1e-12), jnp.float32(0.0))


if __name__ == "__main__":
    # Small deterministic example shapes
    B, L, D = 2, 8, 32          # L-1 = 7 supervised positions
    NUM_ITEMS = 60              # table has num_items + 1 = 61 rows
    K = 16                      # num_negatives (small for the example)
    TEMP = 0.05

    key = jax.random.PRNGKey(0)
    k_out, k_items, k_tgt, k_w, k_neg = jax.random.split(key, 5)

    output_embeddings = jax.random.normal(k_out, (B, L - 1, D), dtype=jnp.float32)
    all_item_embeddings = jax.random.normal(k_items, (NUM_ITEMS + 1, D),
                                            dtype=jnp.float32)
    target_ids = jax.random.randint(k_tgt, (B, L - 1), 4, NUM_ITEMS + 1,
                                    dtype=jnp.int32)
    supervision_weights = (jax.random.uniform(k_w, (B, L - 1)) > 0.3
                           ).astype(jnp.float32)

    loss = sampled_softmax_loss(output_embeddings, target_ids,
                                all_item_embeddings, supervision_weights,
                                num_negatives=K, temperature=TEMP,
                                rng_key=k_neg)
    loss = jax.block_until_ready(loss)
    assert jnp.isfinite(loss)
    print("KERNEL_OK")
</pallas_src>

<mosaic_0001>
module attributes {stable_mosaic.version = 11 : i64} {
  func.func @_l2_normalize_kernel(%arg0: i32, %arg1: memref<512x128xf32, #tpu.memory_space<vmem>>, %arg2: memref<512x128xbf16, #tpu.memory_space<vmem>>) attributes {dimension_semantics = [#tpu.dimension_semantics<parallel>], iteration_bounds = array<i64: 1>, scalar_prefetch = 0 : i64, scratch_operands = 0 : i64, tpu.core_type = #tpu.core_type<tc>, window_params = [{transform_indices = @transform_0, window_bounds = array<i64: 512, 128>}, {transform_indices = @transform_1, window_bounds = array<i64: 512, 128>}]} {
    %c0 = arith.constant 0 : index
    %c0_0 = arith.constant 0 : index
    %0 = vector.load %arg1[%c0, %c0_0] : memref<512x128xf32, #tpu.memory_space<vmem>>, vector<512x128xf32>
    %1 = arith.mulf %0, %0 : vector<512x128xf32>
    %cst = arith.constant dense<0.000000e+00> : vector<512xf32>
    %2 = vector.multi_reduction <add>, %1, %cst [1] : vector<512x128xf32> to vector<512xf32>
    %3 = vector.shape_cast %2 : vector<512xf32> to vector<512x1xf32>
    %cst_1 = arith.constant 1.000000e-24 : f32
    %4 = vector.broadcast %cst_1 : f32 to vector<512x1xf32>
    %5 = arith.maximumf %3, %4 : vector<512x1xf32>
    %6 = math.rsqrt %5 : vector<512x1xf32>
    %7 = vector.broadcast %6 : vector<512x1xf32> to vector<512x128xf32>
    %8 = arith.mulf %0, %7 : vector<512x128xf32>
    %9 = arith.truncf %8 : vector<512x128xf32> to vector<512x128xbf16>
    %c0_2 = arith.constant 0 : index
    %c0_3 = arith.constant 0 : index
    %10 = vector.load %arg2[%c0_2, %c0_3] : memref<512x128xbf16, #tpu.memory_space<vmem>>, vector<512x128xbf16>
    tpu.vector_store %arg2[%c0_2, %c0_3], %9 {strides = array<i32>} : memref<512x128xbf16, #tpu.memory_space<vmem>>, vector<512x128xbf16>,
    return
  }
  func.func @transform_0(%arg0: i32) -> (i32, i32) {
    %c0_i32 = arith.constant 0 : i32
    %c0_i32_0 = arith.constant 0 : i32
    return %arg0, %c0_i32 : i32, i32
  }
  func.func @transform_1(%arg0: i32) -> (i32, i32) {
    %c0_i32 = arith.constant 0 : i32
    %c0_i32_0 = arith.constant 0 : i32
    return %arg0, %c0_i32 : i32, i32
  }
}

</mosaic_0001>

<llo_original>
// kernel: tpu_custom_call.1
$region0: #{tpu_custom_call.1}
  #allocation0 [shape = 'u32[]', space=smem, size = 0x4, offset = 0x4, fixed_abs, tag = 'smem constant byte address 0x4 - core index']
  #allocation1 [shape = 'u32[144,128]{1,0:T(1,128)}', space=vmem, size = 0x12000, scoped, tag = 'internal scratch']
  %s0 = inlined_call_operand.hbm [shape: f32[512,128], index: 0, kind: input, shape index: {}]
  %s1 = inlined_call_operand.hbm [shape: bf16[512,128], index: 1, kind: output, shape index: {}]
  %s2 = sld [smem:[#allocation0]]
  $region18: #{tpu_custom_call.1} parent=0
    _
  %s4 = ssub.s32 1, %s2
  %s5 = scalar_select 0, %s4, %s2
  $region1: #{tpu_custom_call.1} parent=0
    #allocation2 [shape = 'u8[262144]{0}', space=vmem, size = 0x40000, scoped, tag = 'input window, operand 0, single buffered']
    #allocation3 [shape = 's32[1]{0}', space=sflag, size = 0x4, scoped, tag = 'scoped memory for tpu_custom_call.1']
    #allocation4 [shape = 's32[1]{0}', space=sflag, size = 0x4, scoped, tag = 'scoped memory for tpu_custom_call.1']
    #allocation5 [shape = 'u8[131072]{0}', space=vmem, size = 0x20000, scoped, tag = 'output window, operand 0, single buffered']
    %6 = vsyncpa [#allocation3], 0
    %7 = vsyncpa [#allocation4], 0
    // Predicated region
    $region2: #{tpu_custom_call.1} parent=1 // pred_check
      _
    $region3: #{tpu_custom_call.1} parent=1 // pred_check_branch
      %9 = sbr.rel (0) target = $region5
    $region4: #{tpu_custom_call.1} parent=1 // pred_region
      %s11 = ssub.s32 8192, 8192
      %12 = vsyncadd [#allocation3], %s11
      %s13 = sshll.u32 [#allocation2], 4
      %s14 = int_to_ptr.vmem [resolvable:$true] %s13
      %19 = dma.hbm_to_vmem [thread:$0]  %s0, 8192, %s14, [#allocation3], 128, 128, 8
    $region5: #{tpu_custom_call.1} parent=1 // pred_fallthru
      _
    // Predicated region
    $region6: #{tpu_custom_call.1} parent=1 // pred_check
      _
    $region7: #{tpu_custom_call.1} parent=1 // pred_check_branch
      %21 = sbr.rel (0) target = $region9
    $region8: #{tpu_custom_call.1} parent=1 // pred_region
      %22 = dma.done [#allocation3], 8192
    $region9: #{tpu_custom_call.1} parent=1 // pred_fallthru
      _
    %v23 = vld [vmem:[#allocation2] sm:$0xff]
    %v24 = vld [vmem:[#allocation2 + $0x8] sm:$0xff]
    %v25 = vld [vmem:[#allocation2 + $0x10] sm:$0xff]
    %v26 = vld [vmem:[#allocation2 + $0x18] sm:$0xff]
    %v27 = vld [vmem:[#allocation2 + $0x20] sm:$0xff]
    %v28 = vld [vmem:[#allocation2 + $0x28] sm:$0xff]
    %v29 = vld [vmem:[#allocation2 + $0x30] sm:$0xff]
    %v30 = vld [vmem:[#allocation2 + $0x38] sm:$0xff]
    %v31 = vld [vmem:[#allocation2 + $0x40] sm:$0xff]
    %v32 = vld [vmem:[#allocation2 + $0x48] sm:$0xff]
    %v33 = vld [vmem:[#allocation2 + $0x50] sm:$0xff]
    %v34 = vld [vmem:[#allocation2 + $0x58] sm:$0xff]
    %v35 = vld [vmem:[#allocation2 + $0x60] sm:$0xff]
    %v36 = vld [vmem:[#allocation2 + $0x68] sm:$0xff]
    %v37 = vld [vmem:[#allocation2 + $0x70] sm:$0xff]
    %v38 = vld [vmem:[#allocation2 + $0x78] sm:$0xff]
    %v39 = vld [vmem:[#allocation2 + $0x80] sm:$0xff]
    %v40 = vld [vmem:[#allocation2 + $0x88] sm:$0xff]
    %v41 = vld [vmem:[#allocation2 + $0x90] sm:$0xff]
    %v42 = vld [vmem:[#allocation2 + $0x98] sm:$0xff]
    %v43 = vld [vmem:[#allocation2 + $0xa0] sm:$0xff]
    %v44 = vld [vmem:[#allocation2 + $0xa8] sm:$0xff]
    %v45 = vld [vmem:[#allocation2 + $0xb0] sm:$0xff]
    %v46 = vld [vmem:[#allocation2 + $0xb8] sm:$0xff]
    %v47 = vld [vmem:[#allocation2 + $0xc0] sm:$0xff]
    %v48 = vld [vmem:[#allocation2 + $0xc8] sm:$0xff]
    %v49 = vld [vmem:[#allocation2 + $0xd0] sm:$0xff]
    %v50 = vld [vmem:[#allocation2 + $0xd8] sm:$0xff]
    %v51 = vld [vmem:[#allocation2 + $0xe0] sm:$0xff]
    %v52 = vld [vmem:[#allocation2 + $0xe8] sm:$0xff]
    %v53 = vld [vmem:[#allocation2 + $0xf0] sm:$0xff]
    %v54 = vld [vmem:[#allocation2 + $0xf8] sm:$0xff]
    %v55 = vld [vmem:[#allocation2 + $0x100] sm:$0xff]
    %v56 = vld [vmem:[#allocation2 + $0x108] sm:$0xff]
    %v57 = vld [vmem:[#allocation2 + $0x110] sm:$0xff]
    %v58 = vld [vmem:[#allocation2 + $0x118] sm:$0xff]
    %v59 = vld [vmem:[#allocation2 + $0x120] sm:$0xff]
    %v60 = vld [vmem:[#allocation2 + $0x128] sm:$0xff]
    %v61 = vld [vmem:[#allocation2 + $0x130] sm:$0xff]
    %v62 = vld [vmem:[#allocation2 + $0x138] sm:$0xff]
    %v63 = vld [vmem:[#allocation2 + $0x140] sm:$0xff]
    %v64 = vld [vmem:[#allocation2 + $0x148] sm:$0xff]
    %v65 = vld [vmem:[#allocation2 + $0x150] sm:$0xff]
    %v66 = vld [vmem:[#allocation2 + $0x158] sm:$0xff]
    %v67 = vld [vmem:[#allocation2 + $0x160] sm:$0xff]
    %v68 = vld [vmem:[#allocation2 + $0x168] sm:$0xff]
    %v69 = vld [vmem:[#allocation2 + $0x170] sm:$0xff]
    %v70 = vld [vmem:[#allocation2 + $0x178] sm:$0xff]
    %v71 = vld [vmem:[#allocation2 + $0x180] sm:$0xff]
    %v72 = vld [vmem:[#allocation2 + $0x188] sm:$0xff]
    %v73 = vld [vmem:[#allocation2 + $0x190] sm:$0xff]
    %v74 = vld [vmem:[#allocation2 + $0x198] sm:$0xff]
    %v75 = vld [vmem:[#allocation2 + $0x1a0] sm:$0xff]
    %v76 = vld [vmem:[#allocation2 + $0x1a8] sm:$0xff]
    %v77 = vld [vmem:[#allocation2 + $0x1b0] sm:$0xff]
    %v78 = vld [vmem:[#allocation2 + $0x1b8] sm:$0xff]
    %v79 = vld [vmem:[#allocation2 + $0x1c0] sm:$0xff]
    %v80 = vld [vmem:[#allocation2 + $0x1c8] sm:$0xff]
    %v81 = vld [vmem:[#allocation2 + $0x1d0] sm:$0xff]
    %v82 = vld [vmem:[#allocation2 + $0x1d8] sm:$0xff]
    %v83 = vld [vmem:[#allocation2 + $0x1e0] sm:$0xff]
    %v84 = vld [vmem:[#allocation2 + $0x1e8] sm:$0xff]
    %v85 = vld [vmem:[#allocation2 + $0x1f0] sm:$0xff]
    %v86 = vld [vmem:[#allocation2 + $0x1f8] sm:$0xff]
    %v87 = vmul.f32 %v23, %v23
    %v88 = vmul.f32 %v24, %v24
    %v89 = vmul.f32 %v25, %v25
    %v90 = vmul.f32 %v26, %v26
    %v91 = vmul.f32 %v27, %v27
    %v92 = vmul.f32 %v28, %v28
    %v93 = vmul.f32 %v29, %v29
    %v94 = vmul.f32 %v30, %v30
    %v95 = vmul.f32 %v31, %v31
    %v96 = vmul.f32 %v32, %v32
    %v97 = vmul.f32 %v33, %v33
    %v98 = vmul.f32 %v34, %v34
    %v99 = vmul.f32 %v35, %v35
    %v100 = vmul.f32 %v36, %v36
    %v101 = vmul.f32 %v37, %v37
    %v102 = vmul.f32 %v38, %v38
    %v103 = vmul.f32 %v39, %v39
    %v104 = vmul.f32 %v40, %v40
    %v105 = vmul.f32 %v41, %v41
    %v106 = vmul.f32 %v42, %v42
    %v107 = vmul.f32 %v43, %v43
    %v108 = vmul.f32 %v44, %v44
    %v109 = vmul.f32 %v45, %v45
    %v110 = vmul.f32 %v46, %v46
    %v111 = vmul.f32 %v47, %v47
    %v112 = vmul.f32 %v48, %v48
    %v113 = vmul.f32 %v49, %v49
    %v114 = vmul.f32 %v50, %v50
    %v115 = vmul.f32 %v51, %v51
    %v116 = vmul.f32 %v52, %v52
    %v117 = vmul.f32 %v53, %v53
    %v118 = vmul.f32 %v54, %v54
    %v119 = vmul.f32 %v55, %v55
    %v120 = vmul.f32 %v56, %v56
    %v121 = vmul.f32 %v57, %v57
    %v122 = vmul.f32 %v58, %v58
    %v123 = vmul.f32 %v59, %v59
    %v124 = vmul.f32 %v60, %v60
    %v125 = vmul.f32 %v61, %v61
    %v126 = vmul.f32 %v62, %v62
    %v127 = vmul.f32 %v63, %v63
    %v128 = vmul.f32 %v64, %v64
    %v129 = vmul.f32 %v65, %v65
    %v130 = vmul.f32 %v66, %v66
    %v131 = vmul.f32 %v67, %v67
    %v132 = vmul.f32 %v68, %v68
    %v133 = vmul.f32 %v69, %v69
    %v134 = vmul.f32 %v70, %v70
    %v135 = vmul.f32 %v71, %v71
    %v136 = vmul.f32 %v72, %v72
    %v137 = vmul.f32 %v73, %v73
    %v138 = vmul.f32 %v74, %v74
    %v139 = vmul.f32 %v75, %v75
    %v140 = vmul.f32 %v76, %v76
    %v141 = vmul.f32 %v77, %v77
    %v142 = vmul.f32 %v78, %v78
    %v143 = vmul.f32 %v79, %v79
    %v144 = vmul.f32 %v80, %v80
    %v145 = vmul.f32 %v81, %v81
    %v146 = vmul.f32 %v82, %v82
    %v147 = vmul.f32 %v83, %v83
    %v148 = vmul.f32 %v84, %v84
    %v149 = vmul.f32 %v85, %v85
    %v150 = vmul.f32 %v86, %v86
    %151 = vadd.xlane.f32.xlu0 %v87
    %v152 = vpop.xlane.xlu0 %151
    %153 = vadd.xlane.f32.xlu0 %v88
    %v154 = vpop.xlane.xlu0 %153
    %155 = vadd.xlane.f32.xlu0 %v89
    %v156 = vpop.xlane.xlu0 %155
    %157 = vadd.xlane.f32.xlu0 %v90
    %v158 = vpop.xlane.xlu0 %157
    %159 = vadd.xlane.f32.xlu0 %v91
    %v160 = vpop.xlane.xlu0 %159
    %161 = vadd.xlane.f32.xlu0 %v92
    %v162 = vpop.xlane.xlu0 %161
    %163 = vadd.xlane.f32.xlu0 %v93
    %v164 = vpop.xlane.xlu0 %163
    %165 = vadd.xlane.f32.xlu0 %v94
    %v166 = vpop.xlane.xlu0 %165
    %167 = vadd.xlane.f32.xlu0 %v95
    %v168 = vpop.xlane.xlu0 %167
    %169 = vadd.xlane.f32.xlu0 %v96
    %v170 = vpop.xlane.xlu0 %169
    %171 = vadd.xlane.f32.xlu0 %v97
    %v172 = vpop.xlane.xlu0 %171
    %173 = vadd.xlane.f32.xlu0 %v98
    %v174 = vpop.xlane.xlu0 %173
    %175 = vadd.xlane.f32.xlu0 %v99
    %v176 = vpop.xlane.xlu0 %175
    %177 = vadd.xlane.f32.xlu0 %v100
    %v178 = vpop.xlane.xlu0 %177
    %179 = vadd.xlane.f32.xlu0 %v101
    %v180 = vpop.xlane.xlu0 %179
    %181 = vadd.xlane.f32.xlu0 %v102
    %v182 = vpop.xlane.xlu0 %181
    %183 = vadd.xlane.f32.xlu0 %v103
    %v184 = vpop.xlane.xlu0 %183
    %185 = vadd.xlane.f32.xlu0 %v104
    %v186 = vpop.xlane.xlu0 %185
    %187 = vadd.xlane.f32.xlu0 %v105
    %v188 = vpop.xlane.xlu0 %187
    %189 = vadd.xlane.f32.xlu0 %v106
    %v190 = vpop.xlane.xlu0 %189
    %191 = vadd.xlane.f32.xlu0 %v107
    %v192 = vpop.xlane.xlu0 %191
    %193 = vadd.xlane.f32.xlu0 %v108
    %v194 = vpop.xlane.xlu0 %193
    %195 = vadd.xlane.f32.xlu0 %v109
    %v196 = vpop.xlane.xlu0 %195
    %197 = vadd.xlane.f32.xlu0 %v110
    %v198 = vpop.xlane.xlu0 %197
    %199 = vadd.xlane.f32.xlu0 %v111
    %v200 = vpop.xlane.xlu0 %199
    %201 = vadd.xlane.f32.xlu0 %v112
    %v202 = vpop.xlane.xlu0 %201
    %203 = vadd.xlane.f32.xlu0 %v113
    %v204 = vpop.xlane.xlu0 %203
    %205 = vadd.xlane.f32.xlu0 %v114
    %v206 = vpop.xlane.xlu0 %205
    %207 = vadd.xlane.f32.xlu0 %v115
    %v208 = vpop.xlane.xlu0 %207
    %209 = vadd.xlane.f32.xlu0 %v116
    %v210 = vpop.xlane.xlu0 %209
    %211 = vadd.xlane.f32.xlu0 %v117
    %v212 = vpop.xlane.xlu0 %211
    %213 = vadd.xlane.f32.xlu0 %v118
    %v214 = vpop.xlane.xlu0 %213
    %215 = vadd.xlane.f32.xlu0 %v119
    %v216 = vpop.xlane.xlu0 %215
    %217 = vadd.xlane.f32.xlu0 %v120
    %v218 = vpop.xlane.xlu0 %217
    %219 = vadd.xlane.f32.xlu0 %v121
    %v220 = vpop.xlane.xlu0 %219
    %221 = vadd.xlane.f32.xlu0 %v122
    %v222 = vpop.xlane.xlu0 %221
    %223 = vadd.xlane.f32.xlu0 %v123
    %v224 = vpop.xlane.xlu0 %223
    %225 = vadd.xlane.f32.xlu0 %v124
    %v226 = vpop.xlane.xlu0 %225
    %227 = vadd.xlane.f32.xlu0 %v125
    %v228 = vpop.xlane.xlu0 %227
    %229 = vadd.xlane.f32.xlu0 %v126
    %v230 = vpop.xlane.xlu0 %229
    %231 = vadd.xlane.f32.xlu0 %v127
    %v232 = vpop.xlane.xlu0 %231
    %233 = vadd.xlane.f32.xlu0 %v128
    %v234 = vpop.xlane.xlu0 %233
    %235 = vadd.xlane.f32.xlu0 %v129
    %v236 = vpop.xlane.xlu0 %235
    %237 = vadd.xlane.f32.xlu0 %v130
    %v238 = vpop.xlane.xlu0 %237
    %239 = vadd.xlane.f32.xlu0 %v131
    %v240 = vpop.xlane.xlu0 %239
    %241 = vadd.xlane.f32.xlu0 %v132
    %v242 = vpop.xlane.xlu0 %241
    %243 = vadd.xlane.f32.xlu0 %v133
    %v244 = vpop.xlane.xlu0 %243
    %245 = vadd.xlane.f32.xlu0 %v134
    %v246 = vpop.xlane.xlu0 %245
    %247 = vadd.xlane.f32.xlu0 %v135
    %v248 = vpop.xlane.xlu0 %247
    %249 = vadd.xlane.f32.xlu0 %v136
    %v250 = vpop.xlane.xlu0 %249
    %251 = vadd.xlane.f32.xlu0 %v137
    %v252 = vpop.xlane.xlu0 %251
    %253 = vadd.xlane.f32.xlu0 %v138
    %v254 = vpop.xlane.xlu0 %253
    %255 = vadd.xlane.f32.xlu0 %v139
    %v256 = vpop.xlane.xlu0 %255
    %257 = vadd.xlane.f32.xlu0 %v140
    %v258 = vpop.xlane.xlu0 %257
    %259 = vadd.xlane.f32.xlu0 %v141
    %v260 = vpop.xlane.xlu0 %259
    %261 = vadd.xlane.f32.xlu0 %v142
    %v262 = vpop.xlane.xlu0 %261
    %263 = vadd.xlane.f32.xlu0 %v143
    %v264 = vpop.xlane.xlu0 %263
    %265 = vadd.xlane.f32.xlu0 %v144
    %v266 = vpop.xlane.xlu0 %265
    %267 = vadd.xlane.f32.xlu0 %v145
    %v268 = vpop.xlane.xlu0 %267
    %269 = vadd.xlane.f32.xlu0 %v146
    %v270 = vpop.xlane.xlu0 %269
    %271 = vadd.xlane.f32.xlu0 %v147
    %v272 = vpop.xlane.xlu0 %271
    %273 = vadd.xlane.f32.xlu0 %v148
    %v274 = vpop.xlane.xlu0 %273
    %275 = vadd.xlane.f32.xlu0 %v149
    %v276 = vpop.xlane.xlu0 %275
    %277 = vadd.xlane.f32.xlu0 %v150
    %v278 = vpop.xlane.xlu0 %277
    %v279 = vmax.f32 %v152, 1e-24
    %v280 = vmax.f32 %v154, 1e-24
    %v281 = vmax.f32 %v156, 1e-24
    %v282 = vmax.f32 %v158, 1e-24
    %v283 = vmax.f32 %v160, 1e-24
    %v284 = vmax.f32 %v162, 1e-24
    %v285 = vmax.f32 %v164, 1e-24
    %v286 = vmax.f32 %v166, 1e-24
    %v287 = vmax.f32 %v168, 1e-24
    %v288 = vmax.f32 %v170, 1e-24
    %v289 = vmax.f32 %v172, 1e-24
    %v290 = vmax.f32 %v174, 1e-24
    %v291 = vmax.f32 %v176, 1e-24
    %v292 = vmax.f32 %v178, 1e-24
    %v293 = vmax.f32 %v180, 1e-24
    %v294 = vmax.f32 %v182, 1e-24
    %v295 = vmax.f32 %v184, 1e-24
    %v296 = vmax.f32 %v186, 1e-24
    %v297 = vmax.f32 %v188, 1e-24
    %v298 = vmax.f32 %v190, 1e-24
    %v299 = vmax.f32 %v192, 1e-24
    %v300 = vmax.f32 %v194, 1e-24
    %v301 = vmax.f32 %v196, 1e-24
    %v302 = vmax.f32 %v198, 1e-24
    %v303 = vmax.f32 %v200, 1e-24
    %v304 = vmax.f32 %v202, 1e-24
    %v305 = vmax.f32 %v204, 1e-24
    %v306 = vmax.f32 %v206, 1e-24
    %v307 = vmax.f32 %v208, 1e-24
    %v308 = vmax.f32 %v210, 1e-24
    %v309 = vmax.f32 %v212, 1e-24
    %v310 = vmax.f32 %v214, 1e-24
    %v311 = vmax.f32 %v216, 1e-24
    %v312 = vmax.f32 %v218, 1e-24
    %v313 = vmax.f32 %v220, 1e-24
    %v314 = vmax.f32 %v222, 1e-24
    %v315 = vmax.f32 %v224, 1e-24
    %v316 = vmax.f32 %v226, 1e-24
    %v317 = vmax.f32 %v228, 1e-24
    %v318 = vmax.f32 %v230, 1e-24
    %v319 = vmax.f32 %v232, 1e-24
    %v320 = vmax.f32 %v234, 1e-24
    %v321 = vmax.f32 %v236, 1e-24
    %v322 = vmax.f32 %v238, 1e-24
    %v323 = vmax.f32 %v240, 1e-24
    %v324 = vmax.f32 %v242, 1e-24
    %v325 = vmax.f32 %v244, 1e-24
    %v326 = vmax.f32 %v246, 1e-24
    %v327 = vmax.f32 %v248, 1e-24
    %v328 = vmax.f32 %v250, 1e-24
    %v329 = vmax.f32 %v252, 1e-24
    %v330 = vmax.f32 %v254, 1e-24
    %v331 = vmax.f32 %v256, 1e-24
    %v332 = vmax.f32 %v258, 1e-24
    %v333 = vmax.f32 %v260, 1e-24
    %v334 = vmax.f32 %v262, 1e-24
    %v335 = vmax.f32 %v264, 1e-24
    %v336 = vmax.f32 %v266, 1e-24
    %v337 = vmax.f32 %v268, 1e-24
    %v338 = vmax.f32 %v270, 1e-24
    %v339 = vmax.f32 %v272, 1e-24
    %v340 = vmax.f32 %v274, 1e-24
    %v341 = vmax.f32 %v276, 1e-24
    %v342 = vmax.f32 %v278, 1e-24
    %v343 = vrsqrt.pop %v279
    %v344 = vrsqrt.pop %v280
    %v345 = vrsqrt.pop %v281
    %v346 = vrsqrt.pop %v282
    %v347 = vrsqrt.pop %v283
    %v348 = vrsqrt.pop %v284
    %v349 = vrsqrt.pop %v285
    %v350 = vrsqrt.pop %v286
    %v351 = vrsqrt.pop %v287
    %v352 = vrsqrt.pop %v288
    %v353 = vrsqrt.pop %v289
    %v354 = vrsqrt.pop %v290
    %v355 = vrsqrt.pop %v291
    %v356 = vrsqrt.pop %v292
    %v357 = vrsqrt.pop %v293
    %v358 = vrsqrt.pop %v294
    %v359 = vrsqrt.pop %v295
    %v360 = vrsqrt.pop %v296
    %v361 = vrsqrt.pop %v297
    %v362 = vrsqrt.pop %v298
    %v363 = vrsqrt.pop %v299
    %v364 = vrsqrt.pop %v300
    %v365 = vrsqrt.pop %v301
    %v366 = vrsqrt.pop %v302
    %v367 = vrsqrt.pop %v303
    %v368 = vrsqrt.pop %v304
    %v369 = vrsqrt.pop %v305
    %v370 = vrsqrt.pop %v306
    %v371 = vrsqrt.pop %v307
    %v372 = vrsqrt.pop %v308
    %v373 = vrsqrt.pop %v309
    %v374 = vrsqrt.pop %v310
    %v375 = vrsqrt.pop %v311
    %v376 = vrsqrt.pop %v312
    %v377 = vrsqrt.pop %v313
    %v378 = vrsqrt.pop %v314
    %v379 = vrsqrt.pop %v315
    %v380 = vrsqrt.pop %v316
    %v381 = vrsqrt.pop %v317
    %v382 = vrsqrt.pop %v318
    %v383 = vrsqrt.pop %v319
    %v384 = vrsqrt.pop %v320
    %v385 = vrsqrt.pop %v321
    %v386 = vrsqrt.pop %v322
    %v387 = vrsqrt.pop %v323
    %v388 = vrsqrt.pop %v324
    %v389 = vrsqrt.pop %v325
    %v390 = vrsqrt.pop %v326
    %v391 = vrsqrt.pop %v327
    %v392 = vrsqrt.pop %v328
    %v393 = vrsqrt.pop %v329
    %v394 = vrsqrt.pop %v330
    %v395 = vrsqrt.pop %v331
    %v396 = vrsqrt.pop %v332
    %v397 = vrsqrt.pop %v333
    %v398 = vrsqrt.pop %v334
    %v399 = vrsqrt.pop %v335
    %v400 = vrsqrt.pop %v336
    %v401 = vrsqrt.pop %v337
    %v402 = vrsqrt.pop %v338
    %v403 = vrsqrt.pop %v339
    %v404 = vrsqrt.pop %v340
    %v405 = vrsqrt.pop %v341
    %v406 = vrsqrt.pop %v342
    %v407 = vmul.f32 %v23, %v343
    %v408 = vmul.f32 %v24, %v344
    %v409 = vmul.f32 %v25, %v345
    %v410 = vmul.f32 %v26, %v346
    %v411 = vmul.f32 %v27, %v347
    %v412 = vmul.f32 %v28, %v348
    %v413 = vmul.f32 %v29, %v349
    %v414 = vmul.f32 %v30, %v350
    %v415 = vmul.f32 %v31, %v351
    %v416 = vmul.f32 %v32, %v352
    %v417 = vmul.f32 %v33, %v353
    %v418 = vmul.f32 %v34, %v354
    %v419 = vmul.f32 %v35, %v355
    %v420 = vmul.f32 %v36, %v356
    %v421 = vmul.f32 %v37, %v357
    %v422 = vmul.f32 %v38, %v358
    %v423 = vmul.f32 %v39, %v359
    %v424 = vmul.f32 %v40, %v360
    %v425 = vmul.f32 %v41, %v361
    %v426 = vmul.f32 %v42, %v362
    %v427 = vmul.f32 %v43, %v363
    %v428 = vmul.f32 %v44, %v364
    %v429 = vmul.f32 %v45, %v365
    %v430 = vmul.f32 %v46, %v366
    %v431 = vmul.f32 %v47, %v367
    %v432 = vmul.f32 %v48, %v368
    %v433 = vmul.f32 %v49, %v369
    %v434 = vmul.f32 %v50, %v370
    %v435 = vmul.f32 %v51, %v371
    %v436 = vmul.f32 %v52, %v372
    %v437 = vmul.f32 %v53, %v373
    %v438 = vmul.f32 %v54, %v374
    %v439 = vmul.f32 %v55, %v375
    %v440 = vmul.f32 %v56, %v376
    %v441 = vmul.f32 %v57, %v377
    %v442 = vmul.f32 %v58, %v378
    %v443 = vmul.f32 %v59, %v379
    %v444 = vmul.f32 %v60, %v380
    %v445 = vmul.f32 %v61, %v381
    %v446 = vmul.f32 %v62, %v382
    %v447 = vmul.f32 %v63, %v383
    %v448 = vmul.f32 %v64, %v384
    %v449 = vmul.f32 %v65, %v385
    %v450 = vmul.f32 %v66, %v386
    %v451 = vmul.f32 %v67, %v387
    %v452 = vmul.f32 %v68, %v388
    %v453 = vmul.f32 %v69, %v389
    %v454 = vmul.f32 %v70, %v390
    %v455 = vmul.f32 %v71, %v391
    %v456 = vmul.f32 %v72, %v392
    %v457 = vmul.f32 %v73, %v393
    %v458 = vmul.f32 %v74, %v394
    %v459 = vmul.f32 %v75, %v395
    %v460 = vmul.f32 %v76, %v396
    %v461 = vmul.f32 %v77, %v397
    %v462 = vmul.f32 %v78, %v398
    %v463 = vmul.f32 %v79, %v399
    %v464 = vmul.f32 %v80, %v400
    %v465 = vmul.f32 %v81, %v401
    %v466 = vmul.f32 %v82, %v402
    %v467 = vmul.f32 %v83, %v403
    %v468 = vmul.f32 %v84, %v404
    %v469 = vmul.f32 %v85, %v405
    %v470 = vmul.f32 %v86, %v406
    %v471 = vpack.c.bf16 %v408, %v407
    %v472 = vpack.c.bf16 %v410, %v409
    %v473 = vpack.c.bf16 %v412, %v411
    %v474 = vpack.c.bf16 %v414, %v413
    %v475 = vpack.c.bf16 %v416, %v415
    %v476 = vpack.c.bf16 %v418, %v417
    %v477 = vpack.c.bf16 %v420, %v419
    %v478 = vpack.c.bf16 %v422, %v421
    %v479 = vpack.c.bf16 %v424, %v423
    %v480 = vpack.c.bf16 %v426, %v425
    %v481 = vpack.c.bf16 %v428, %v427
    %v482 = vpack.c.bf16 %v430, %v429
    %v483 = vpack.c.bf16 %v432, %v431
    %v484 = vpack.c.bf16 %v434, %v433
    %v485 = vpack.c.bf16 %v436, %v435
    %v486 = vpack.c.bf16 %v438, %v437
    %v487 = vpack.c.bf16 %v440, %v439
    %v488 = vpack.c.bf16 %v442, %v441
    %v489 = vpack.c.bf16 %v444, %v443
    %v490 = vpack.c.bf16 %v446, %v445
    %v491 = vpack.c.bf16 %v448, %v447
    %v492 = vpack.c.bf16 %v450, %v449
    %v493 = vpack.c.bf16 %v452, %v451
    %v494 = vpack.c.bf16 %v454, %v453
    %v495 = vpack.c.bf16 %v456, %v455
    %v496 = vpack.c.bf16 %v458, %v457
    %v497 = vpack.c.bf16 %v460, %v459
    %v498 = vpack.c.bf16 %v462, %v461
    %v499 = vpack.c.bf16 %v464, %v463
    %v500 = vpack.c.bf16 %v466, %v465
    %v501 = vpack.c.bf16 %v468, %v467
    %v502 = vpack.c.bf16 %v470, %v469
    %v535 = vunpack.c.l.b16 %v471
    %v536 = vunpack.c.h.b16 %v471
    %v537 = vunpack.c.l.b16 %v472
    %v538 = vunpack.c.h.b16 %v472
    %v539 = vunpack.c.l.b16 %v473
    %v540 = vunpack.c.h.b16 %v473
    %v541 = vunpack.c.l.b16 %v474
    %v542 = vunpack.c.h.b16 %v474
    %v543 = vunpack.c.l.b16 %v475
    %v544 = vunpack.c.h.b16 %v475
    %v545 = vunpack.c.l.b16 %v476
    %v546 = vunpack.c.h.b16 %v476
    %v547 = vunpack.c.l.b16 %v477
    %v548 = vunpack.c.h.b16 %v477
    %v549 = vunpack.c.l.b16 %v478
    %v550 = vunpack.c.h.b16 %v478
    %v551 = vunpack.c.l.b16 %v479
    %v552 = vunpack.c.h.b16 %v479
    %v553 = vunpack.c.l.b16 %v480
    %v554 = vunpack.c.h.b16 %v480
    %v555 = vunpack.c.l.b16 %v481
    %v556 = vunpack.c.h.b16 %v481
    %v557 = vunpack.c.l.b16 %v482
    %v558 = vunpack.c.h.b16 %v482
    %v559 = vunpack.c.l.b16 %v483
    %v560 = vunpack.c.h.b16 %v483
    %v561 = vunpack.c.l.b16 %v484
    %v562 = vunpack.c.h.b16 %v484
    %v563 = vunpack.c.l.b16 %v485
    %v564 = vunpack.c.h.b16 %v485
    %v565 = vunpack.c.l.b16 %v486
    %v566 = vunpack.c.h.b16 %v486
    %v567 = vunpack.c.l.b16 %v487
    %v568 = vunpack.c.h.b16 %v487
    %v569 = vunpack.c.l.b16 %v488
    %v570 = vunpack.c.h.b16 %v488
    %v571 = vunpack.c.l.b16 %v489
    %v572 = vunpack.c.h.b16 %v489
    %v573 = vunpack.c.l.b16 %v490
    %v574 = vunpack.c.h.b16 %v490
    %v575 = vunpack.c.l.b16 %v491
    %v576 = vunpack.c.h.b16 %v491
    %v577 = vunpack.c.l.b16 %v492
    %v578 = vunpack.c.h.b16 %v492
    %v579 = vunpack.c.l.b16 %v493
    %v580 = vunpack.c.h.b16 %v493
    %v581 = vunpack.c.l.b16 %v494
    %v582 = vunpack.c.h.b16 %v494
    %v583 = vunpack.c.l.b16 %v495
    %v584 = vunpack.c.h.b16 %v495
    %v585 = vunpack.c.l.b16 %v496
    %v586 = vunpack.c.h.b16 %v496
    %v587 = vunpack.c.l.b16 %v497
    %v588 = vunpack.c.h.b16 %v497
    %v589 = vunpack.c.l.b16 %v498
    %v590 = vunpack.c.h.b16 %v498
    %v591 = vunpack.c.l.b16 %v499
    %v592 = vunpack.c.h.b16 %v499
    %v593 = vunpack.c.l.b16 %v500
    %v594 = vunpack.c.h.b16 %v500
    %v595 = vunpack.c.l.b16 %v501
    %v596 = vunpack.c.h.b16 %v501
    %v597 = vunpack.c.l.b16 %v502
    %v598 = vunpack.c.h.b16 %v502
    %v599 = vpack.c.b16 %v535, %v535
    %v600 = vpack.c.b16 %v536, %v536
    %v601 = vpack.c.b16 %v537, %v537
    %v602 = vpack.c.b16 %v538, %v538
    %v603 = vpack.c.b16 %v539, %v539
    %v604 = vpack.c.b16 %v540, %v540
    %v605 = vpack.c.b16 %v541, %v541
    %v606 = vpack.c.b16 %v542, %v542
    %v607 = vpack.c.b16 %v543, %v543
    %v608 = vpack.c.b16 %v544, %v544
    %v609 = vpack.c.b16 %v545, %v545
    %v610 = vpack.c.b16 %v546, %v546
    %v611 = vpack.c.b16 %v547, %v547
    %v612 = vpack.c.b16 %v548, %v548
    %v613 = vpack.c.b16 %v549, %v549
    %v614 = vpack.c.b16 %v550, %v550
    %v615 = vpack.c.b16 %v551, %v551
    %v616 = vpack.c.b16 %v552, %v552
    %v617 = vpack.c.b16 %v553, %v553
    %v618 = vpack.c.b16 %v554, %v554
    %v619 = vpack.c.b16 %v555, %v555
    %v620 = vpack.c.b16 %v556, %v556
    %v621 = vpack.c.b16 %v557, %v557
    %v622 = vpack.c.b16 %v558, %v558
    %v623 = vpack.c.b16 %v559, %v559
    %v624 = vpack.c.b16 %v560, %v560
    %v625 = vpack.c.b16 %v561, %v561
    %v626 = vpack.c.b16 %v562, %v562
    %v627 = vpack.c.b16 %v563, %v563
    %v628 = vpack.c.b16 %v564, %v564
    %v629 = vpack.c.b16 %v565, %v565
    %v630 = vpack.c.b16 %v566, %v566
    %v631 = vpack.c.b16 %v567, %v567
    %v632 = vpack.c.b16 %v568, %v568
    %v633 = vpack.c.b16 %v569, %v569
    %v634 = vpack.c.b16 %v570, %v570
    %v635 = vpack.c.b16 %v571, %v571
    %v636 = vpack.c.b16 %v572, %v572
    %v637 = vpack.c.b16 %v573, %v573
    %v638 = vpack.c.b16 %v574, %v574
    %v639 = vpack.c.b16 %v575, %v575
    %v640 = vpack.c.b16 %v576, %v576
    %v641 = vpack.c.b16 %v577, %v577
    %v642 = vpack.c.b16 %v578, %v578
    %v643 = vpack.c.b16 %v579, %v579
    %v644 = vpack.c.b16 %v580, %v580
    %v645 = vpack.c.b16 %v581, %v581
    %v646 = vpack.c.b16 %v582, %v582
    %v647 = vpack.c.b16 %v583, %v583
    %v648 = vpack.c.b16 %v584, %v584
    %v649 = vpack.c.b16 %v585, %v585
    %v650 = vpack.c.b16 %v586, %v586
    %v651 = vpack.c.b16 %v587, %v587
    %v652 = vpack.c.b16 %v588, %v588
    %v653 = vpack.c.b16 %v589, %v589
    %v654 = vpack.c.b16 %v590, %v590
    %v655 = vpack.c.b16 %v591, %v591
    %v656 = vpack.c.b16 %v592, %v592
    %v657 = vpack.c.b16 %v593, %v593
    %v658 = vpack.c.b16 %v594, %v594
    %v659 = vpack.c.b16 %v595, %v595
    %v660 = vpack.c.b16 %v596, %v596
    %v661 = vpack.c.b16 %v597, %v597
    %v662 = vpack.c.b16 %v598, %v598
    %727 = vst [vmem:[#allocation5] sm:$0xf] %v599
    %728 = vst [vmem:[#allocation5 + $0x4] sm:$0xf] %v600
    %729 = vst [vmem:[#allocation5 + $0x8] sm:$0xf] %v601
    %730 = vst [vmem:[#allocation5 + $0xc] sm:$0xf] %v602
    %731 = vst [vmem:[#allocation5 + $0x10] sm:$0xf] %v603
    %732 = vst [vmem:[#allocation5 + $0x14] sm:$0xf] %v604
    %733 = vst [vmem:[#allocation5 + $0x18] sm:$0xf] %v605
    %734 = vst [vmem:[#allocation5 + $0x1c] sm:$0xf] %v606
    %735 = vst [vmem:[#allocation5 + $0x20] sm:$0xf] %v607
    %736 = vst [vmem:[#allocation5 + $0x24] sm:$0xf] %v608
    %737 = vst [vmem:[#allocation5 + $0x28] sm:$0xf] %v609
    %738 = vst [vmem:[#allocation5 + $0x2c] sm:$0xf] %v610
    %739 = vst [vmem:[#allocation5 + $0x30] sm:$0xf] %v611
    %740 = vst [vmem:[#allocation5 + $0x34] sm:$0xf] %v612
    %741 = vst [vmem:[#allocation5 + $0x38] sm:$0xf] %v613
    %742 = vst [vmem:[#allocation5 + $0x3c] sm:$0xf] %v614
    %743 = vst [vmem:[#allocation5 + $0x40] sm:$0xf] %v615
    %744 = vst [vmem:[#allocation5 + $0x44] sm:$0xf] %v616
    %745 = vst [vmem:[#allocation5 + $0x48] sm:$0xf] %v617
    %746 = vst [vmem:[#allocation5 + $0x4c] sm:$0xf] %v618
    %747 = vst [vmem:[#allocation5 + $0x50] sm:$0xf] %v619
    %748 = vst [vmem:[#allocation5 + $0x54] sm:$0xf] %v620
    %749 = vst [vmem:[#allocation5 + $0x58] sm:$0xf] %v621
    %750 = vst [vmem:[#allocation5 + $0x5c] sm:$0xf] %v622
    %751 = vst [vmem:[#allocation5 + $0x60] sm:$0xf] %v623
    %752 = vst [vmem:[#allocation5 + $0x64] sm:$0xf] %v624
    %753 = vst [vmem:[#allocation5 + $0x68] sm:$0xf] %v625
    %754 = vst [vmem:[#allocation5 + $0x6c] sm:$0xf] %v626
    %755 = vst [vmem:[#allocation5 + $0x70] sm:$0xf] %v627
    %756 = vst [vmem:[#allocation5 + $0x74] sm:$0xf] %v628
    %757 = vst [vmem:[#allocation5 + $0x78] sm:$0xf] %v629
    %758 = vst [vmem:[#allocation5 + $0x7c] sm:$0xf] %v630
    %759 = vst [vmem:[#allocation5 + $0x80] sm:$0xf] %v631
    %760 = vst [vmem:[#allocation5 + $0x84] sm:$0xf] %v632
    %761 = vst [vmem:[#allocation5 + $0x88] sm:$0xf] %v633
    %762 = vst [vmem:[#allocation5 + $0x8c] sm:$0xf] %v634
    %763 = vst [vmem:[#allocation5 + $0x90] sm:$0xf] %v635
    %764 = vst [vmem:[#allocation5 + $0x94] sm:$0xf] %v636
    %765 = vst [vmem:[#allocation5 + $0x98] sm:$0xf] %v637
    %766 = vst [vmem:[#allocation5 + $0x9c] sm:$0xf] %v638
    %767 = vst [vmem:[#allocation5 + $0xa0] sm:$0xf] %v639
    %768 = vst [vmem:[#allocation5 + $0xa4] sm:$0xf] %v640
    %769 = vst [vmem:[#allocation5 + $0xa8] sm:$0xf] %v641
    %770 = vst [vmem:[#allocation5 + $0xac] sm:$0xf] %v642
    %771 = vst [vmem:[#allocation5 + $0xb0] sm:$0xf] %v643
    %772 = vst [vmem:[#allocation5 + $0xb4] sm:$0xf] %v644
    %773 = vst [vmem:[#allocation5 + $0xb8] sm:$0xf] %v645
    %774 = vst [vmem:[#allocation5 + $0xbc] sm:$0xf] %v646
    %775 = vst [vmem:[#allocation5 + $0xc0] sm:$0xf] %v647
    %776 = vst [vmem:[#allocation5 + $0xc4] sm:$0xf] %v648
    %777 = vst [vmem:[#allocation5 + $0xc8] sm:$0xf] %v649
    %778 = vst [vmem:[#allocation5 + $0xcc] sm:$0xf] %v650
    %779 = vst [vmem:[#allocation5 + $0xd0] sm:$0xf] %v651
    %780 = vst [vmem:[#allocation5 + $0xd4] sm:$0xf] %v652
    %781 = vst [vmem:[#allocation5 + $0xd8] sm:$0xf] %v653
    %782 = vst [vmem:[#allocation5 + $0xdc] sm:$0xf] %v654
    %783 = vst [vmem:[#allocation5 + $0xe0] sm:$0xf] %v655
    %784 = vst [vmem:[#allocation5 + $0xe4] sm:$0xf] %v656
    %785 = vst [vmem:[#allocation5 + $0xe8] sm:$0xf] %v657
    %786 = vst [vmem:[#allocation5 + $0xec] sm:$0xf] %v658
    %787 = vst [vmem:[#allocation5 + $0xf0] sm:$0xf] %v659
    %788 = vst [vmem:[#allocation5 + $0xf4] sm:$0xf] %v660
    %789 = vst [vmem:[#allocation5 + $0xf8] sm:$0xf] %v661
    %790 = vst [vmem:[#allocation5 + $0xfc] sm:$0xf] %v662
    // Predicated region
    $region10: #{tpu_custom_call.1} parent=1 // pred_check
      _
    $region11: #{tpu_custom_call.1} parent=1 // pred_check_branch
      %792 = sbr.rel (0) target = $region13
    $region12: #{tpu_custom_call.1} parent=1 // pred_region
      %s794 = ssub.s32 4096, 4096
      %795 = vsyncadd [#allocation4], %s794
      %s796 = sshll.u32 [#allocation5], 4
      %s797 = int_to_ptr.vmem [resolvable:$true] %s796
      %802 = dma.vmem_to_hbm [thread:$0]  %s797, 4096, %s1, [#allocation4], 64, 64, 4
    $region13: #{tpu_custom_call.1} parent=1 // pred_fallthru
      _
    // Predicated region
    $region14: #{tpu_custom_call.1} parent=1 // pred_check
      _
    $region15: #{tpu_custom_call.1} parent=1 // pred_check_branch
      %804 = sbr.rel (0) target = $region17
    $region16: #{tpu_custom_call.1} parent=1 // pred_region
      %805 = dma.done [#allocation4], 4096
    $region17: #{tpu_custom_call.1} parent=1 // pred_fallthru
      _
    %806 = vsyncpa [#allocation3], 1
    %807 = vsyncpa [#allocation4], 1

</llo_original>
